<compile_context>
chip_gen: v5e
topology: v5e:2x2
jax: 0.10.0
libtpu: 0.0.40
codegen_flags: <defaults>
</compile_context>

<pallas_src>
import functools
import math

import jax
import jax.numpy as jnp
from jax import lax
from jax.experimental import pallas as pl
from jax.experimental.pallas import tpu as pltpu

LANE = 128          # TPU lane width: feature dims are padded to a multiple.
_SMALL_N = 512      # below this node count, use the fully-fused kernel.


# ---------------------------------------------------------------------------
# small padding helpers
# ---------------------------------------------------------------------------
def _round_up(x, m):
    return (x + m - 1) // m * m


def _pad_to(x, shape):
    pads = [(0, s - d) for d, s in zip(x.shape, shape)]
    return jnp.pad(x, pads)


# ---------------------------------------------------------------------------
# Stage 1 kernel:  XW = X @ W   (row-tiled, lane-dense bf16 output)
# ---------------------------------------------------------------------------
def _xw_kernel(x_ref, w_ref, o_ref):
    o_ref[...] = jnp.dot(
        x_ref[...], w_ref[...], preferred_element_type=jnp.float32
    ).astype(o_ref.dtype)


def _xw_matmul(x_p, w_p, *, tm):
    """x_p: (N_pad, F_in_pad) bf16, w_p: (F_in_pad, F_out_pad) bf16."""
    n_pad, f_in = x_p.shape
    f_out = w_p.shape[1]
    return pl.pallas_call(
        _xw_kernel,
        out_shape=jax.ShapeDtypeStruct((n_pad, f_out), jnp.bfloat16),
        grid=(n_pad // tm,),
        in_specs=[
            pl.BlockSpec((tm, f_in), lambda i: (i, 0)),       # X row tile
            pl.BlockSpec((f_in, f_out), lambda i: (0, 0)),    # W resident
        ],
        out_specs=pl.BlockSpec((tm, f_out), lambda i: (i, 0)),
        compiler_params=pltpu.CompilerParams(
            dimension_semantics=("parallel",)),
        cost_estimate=pl.CostEstimate(
            flops=2 * n_pad * f_in * f_out,
            transcendentals=0,
            bytes_accessed=int(x_p.size * 2 + w_p.size * 2
                               + n_pad * f_out * 2)),
    )(x_p, w_p)


# ---------------------------------------------------------------------------
# Stage 2 kernel:  out = A_hat @ XW + b  (+ optional ReLU)
# Grid = (row tiles, k tiles); k is the reduction axis, accumulated in VMEM.
# ---------------------------------------------------------------------------
def _agg_kernel(a_ref, xw_ref, b_ref, o_ref, acc_ref, *, apply_relu):
    k = pl.program_id(1)

    @pl.when(k == 0)
    def _():
        acc_ref[...] = jnp.zeros_like(acc_ref)

    acc_ref[...] += jnp.dot(
        a_ref[...], xw_ref[...], preferred_element_type=jnp.float32)

    @pl.when(k == pl.num_programs(1) - 1)
    def _():
        y = acc_ref[...] + b_ref[...]
        if apply_relu:
            y = jnp.maximum(y, 0.0)
        o_ref[...] = y.astype(o_ref.dtype)


def _aggregate(a_p, xw_p, b_p, *, apply_relu, out_dtype, tm, tk):
    n_pad = a_p.shape[0]
    f_out = xw_p.shape[1]
    out_bytes = n_pad * f_out * jnp.dtype(out_dtype).itemsize
    return pl.pallas_call(
        functools.partial(_agg_kernel, apply_relu=apply_relu),
        out_shape=jax.ShapeDtypeStruct((n_pad, f_out), out_dtype),
        grid=(n_pad // tm, n_pad // tk),
        in_specs=[
            pl.BlockSpec((tm, tk), lambda i, k: (i, k)),      # A_hat tile
            pl.BlockSpec((tk, f_out), lambda i, k: (k, 0)),   # XW k-tile
            pl.BlockSpec((1, f_out), lambda i, k: (0, 0)),    # bias resident
        ],
        out_specs=pl.BlockSpec((tm, f_out), lambda i, k: (i, 0)),
        scratch_shapes=[pltpu.VMEM((tm, f_out), jnp.float32)],
        compiler_params=pltpu.CompilerParams(
            dimension_semantics=("parallel", "arbitrary")),
        cost_estimate=pl.CostEstimate(
            flops=2 * n_pad * n_pad * f_out,
            transcendentals=0,
            bytes_accessed=int(a_p.size * 2 + xw_p.size * 2
                               + b_p.size * 4 + out_bytes)),
    )(a_p, xw_p, b_p)


# ---------------------------------------------------------------------------
# Fused whole-network kernel for small graphs: everything resident in VMEM,
# one launch, no HBM round-trip for hidden activations.
# ---------------------------------------------------------------------------
def _fused_gcn_kernel(a_ref, x_ref, w_ref, b_ref, o_ref, *, n_layers):
    a = a_ref[...]                       # (N_pad, N_pad) bf16
    h = x_ref[...]                       # (N_pad, F_max) bf16
    for li in range(n_layers):
        xw = jnp.dot(h, w_ref[li], preferred_element_type=jnp.float32)
        y = jnp.dot(a, xw.astype(jnp.bfloat16),
                    preferred_element_type=jnp.float32) + b_ref[li]
        if li < n_layers - 1:
            h = jnp.maximum(y, 0.0).astype(jnp.bfloat16)
        else:
            o_ref[...] = y.astype(o_ref.dtype)


def gcn_forward_fused(x, a_hat, params):
    n, in_dim = x.shape
    out_dim = params[-1][0].shape[1]
    n_layers = len(params)

    n_pad = _round_up(n, 8)
    f_max = _round_up(max([in_dim] + [w.shape[1] for (w, _) in params]), LANE)

    a_p = _pad_to(a_hat, (n_pad, n_pad)).astype(jnp.bfloat16)
    x_p = _pad_to(x, (n_pad, f_max)).astype(jnp.bfloat16)
    w_stack = jnp.stack([_pad_to(w, (f_max, f_max)).astype(jnp.bfloat16)
                         for (w, _) in params])                # (L, F, F)
    b_stack = jnp.stack([_pad_to(b.reshape(1, -1), (1, f_max))
                         for (_, b) in params])                # (L, 1, F) f32

    flops = n_layers * (2 * n_pad * f_max * f_max + 2 * n_pad * n_pad * f_max)
    out = pl.pallas_call(
        functools.partial(_fused_gcn_kernel, n_layers=n_layers),
        out_shape=jax.ShapeDtypeStruct((n_pad, f_max), jnp.float32),
        grid=(1,),
        in_specs=[
            pl.BlockSpec((n_pad, n_pad), lambda i: (0, 0)),
            pl.BlockSpec((n_pad, f_max), lambda i: (0, 0)),
            pl.BlockSpec((n_layers, f_max, f_max), lambda i: (0, 0, 0)),
            pl.BlockSpec((n_layers, 1, f_max), lambda i: (0, 0, 0)),
        ],
        out_specs=pl.BlockSpec((n_pad, f_max), lambda i: (0, 0)),
        compiler_params=pltpu.CompilerParams(
            dimension_semantics=("arbitrary",)),
        cost_estimate=pl.CostEstimate(
            flops=flops, transcendentals=0,
            bytes_accessed=int(a_p.size * 2 + x_p.size * 2 + w_stack.size * 2
                               + b_stack.size * 4 + n_pad * f_max * 4)),
    )(a_p, x_p, w_stack, b_stack)
    return out[:n, :out_dim]


# ---------------------------------------------------------------------------
# Tiled multi-call path (scales to large N)
# ---------------------------------------------------------------------------
def gcn_forward_tiled(x, a_hat, params, *, tm=256, tk=256):
    n = x.shape[0]
    out_dim = params[-1][0].shape[1]
    n_pad = _round_up(n, tm * tk // math.gcd(tm, tk))

    a_p = _pad_to(a_hat, (n_pad, n_pad)).astype(jnp.bfloat16)
    h = _pad_to(x, (n_pad, _round_up(x.shape[1], LANE))).astype(jnp.bfloat16)

    for li, (w, b) in enumerate(params):
        f_in, f_out = w.shape
        f_in_p, f_out_p = _round_up(f_in, LANE), _round_up(f_out, LANE)
        w_p = _pad_to(w, (f_in_p, f_out_p)).astype(jnp.bfloat16)
        b_p = _pad_to(b.reshape(1, f_out), (1, f_out_p))         # f32
        last = li == len(params) - 1

        xw = _xw_matmul(h, w_p, tm=tm)                           # (N_pad, F) bf16
        h = _aggregate(a_p, xw, b_p, apply_relu=not last,
                       out_dtype=jnp.float32 if last else jnp.bfloat16,
                       tm=tm, tk=tk)
    return h[:n, :out_dim]


def gcn_forward(x, a_hat, params, *, tm=256, tk=256, fuse_small=True):
    n = x.shape[0]
    f_max = max([x.shape[1]] + [w.shape[1] for (w, _) in params])
    if fuse_small and n <= _SMALL_N and f_max <= 2 * LANE:
        return gcn_forward_fused(x, a_hat, params)
    return gcn_forward_tiled(x, a_hat, params, tm=tm, tk=tk)


# ---------------------------------------------------------------------------
# Glue: dense symmetric-normalized adjacency (torch_geometric gcn_norm)
# ---------------------------------------------------------------------------
def build_norm_adj(edge_index, num_nodes):
    row, col = edge_index[0], edge_index[1]
    loop = jnp.arange(num_nodes, dtype=edge_index.dtype)
    row = jnp.concatenate([row, loop])          # add self loops
    col = jnp.concatenate([col, loop])
    ew = jnp.ones(row.shape[0], dtype=jnp.float32)
    deg = jnp.zeros((num_nodes,), jnp.float32).at[col].add(ew)
    dinv = jnp.where(deg > 0.0, lax.rsqrt(deg), 0.0)
    norm = dinv[row] * dinv[col]
    # out[i] = sum_{(j->i)} norm_ij * x_j  =>  A_hat[i, j] += norm
    return jnp.zeros((num_nodes, num_nodes), jnp.float32).at[col, row].add(norm)


# ---------------------------------------------------------------------------
# Parameters (Glorot-uniform weights, zero biases).  NOTE: matching the
# PyTorch spec, n_layers == 1 builds a single in_dim -> hid_dim conv.
# ---------------------------------------------------------------------------
def init_gcn_params(key, in_dim, hid_dim, out_dim, n_layers):
    dims = ([in_dim] + [hid_dim] * (n_layers - 1) + [out_dim]
            if n_layers > 1 else [in_dim, hid_dim])
    params = []
    for li in range(len(dims) - 1):
        f_in, f_out = dims[li], dims[li + 1]
        key, sub = jax.random.split(key)
        limit = (6.0 / (f_in + f_out)) ** 0.5
        w = jax.random.uniform(sub, (f_in, f_out), jnp.float32, -limit, limit)
        params.append((w, jnp.zeros((f_out,), jnp.float32)))
    return params


def gcn_reference(x, a_hat, params):
    h = x
    for i, (w, b) in enumerate(params):
        h = a_hat @ (h @ w) + b
        if i < len(params) - 1:
            h = jnp.maximum(h, 0.0)
    return h


# ---------------------------------------------------------------------------
if __name__ == "__main__":
    N, E = 32, 64                       # nodes, directed edges
    in_dim, hid_dim, out_dim, n_layers = 16, 32, 8, 2

    key = jax.random.PRNGKey(0)
    k_x, k_src, k_dst, k_par = jax.random.split(key, 4)

    x = jax.random.normal(k_x, (N, in_dim), jnp.float32)
    edge_index = jnp.stack(
        [jax.random.randint(k_src, (E,), 0, N, dtype=jnp.int32),
         jax.random.randint(k_dst, (E,), 0, N, dtype=jnp.int32)], axis=0)

    a_hat = build_norm_adj(edge_index, N)
    params = init_gcn_params(k_par, in_dim, hid_dim, out_dim, n_layers)

    out_fused = gcn_forward(x, a_hat, params)                     # fused path
    out_tiled = gcn_forward(x, a_hat, params, fuse_small=False)   # tiled path
    jax.block_until_ready((out_fused, out_tiled))

    ref = gcn_reference(x, a_hat, params)
    assert out_fused.shape == (N, out_dim)
    assert out_tiled.shape == (N, out_dim)
    assert jnp.allclose(out_fused, out_tiled, atol=1e-2, rtol=1e-2)
    assert jnp.allclose(out_fused, ref, atol=1e-1, rtol=1e-1)     # bf16 inputs
    print("KERNEL_OK")
</pallas_src>

<mosaic_0001>
module attributes {stable_mosaic.version = 11 : i64} {
  func.func @_fused_gcn_kernel(%arg0: i32, %arg1: memref<32x32xbf16, #tpu.memory_space<vmem>>, %arg2: memref<32x128xbf16, #tpu.memory_space<vmem>>, %arg3: memref<2x128x128xbf16, #tpu.memory_space<vmem>>, %arg4: memref<2x1x128xf32, #tpu.memory_space<vmem>>, %arg5: memref<32x128xf32, #tpu.memory_space<vmem>>) attributes {dimension_semantics = [#tpu.dimension_semantics<arbitrary>], iteration_bounds = array<i64: 1>, scalar_prefetch = 0 : i64, scratch_operands = 0 : i64, tpu.core_type = #tpu.core_type<tc>, window_params = [{pipeline_mode = #tpu.pipeline_mode<synchronous>, transform_indices = @transform_0, window_bounds = array<i64: 32, 32>}, {pipeline_mode = #tpu.pipeline_mode<synchronous>, transform_indices = @transform_1, window_bounds = array<i64: 32, 128>}, {pipeline_mode = #tpu.pipeline_mode<synchronous>, transform_indices = @transform_2, window_bounds = array<i64: 2, 128, 128>}, {pipeline_mode = #tpu.pipeline_mode<synchronous>, transform_indices = @transform_3, window_bounds = array<i64: 2, 1, 128>}, {pipeline_mode = #tpu.pipeline_mode<synchronous>, transform_indices = @transform_4, window_bounds = array<i64: 32, 128>}]} {
    %c0 = arith.constant 0 : index
    %c0_0 = arith.constant 0 : index
    %0 = vector.load %arg1[%c0, %c0_0] : memref<32x32xbf16, #tpu.memory_space<vmem>>, vector<32x32xbf16>
    %c0_1 = arith.constant 0 : index
    %c0_2 = arith.constant 0 : index
    %1 = vector.load %arg2[%c0_1, %c0_2] : memref<32x128xbf16, #tpu.memory_space<vmem>>, vector<32x128xbf16>
    %c0_3 = arith.constant 0 : index
    %c0_4 = arith.constant 0 : index
    %c0_5 = arith.constant 0 : index
    %2 = vector.load %arg3[%c0_3, %c0_4, %c0_5] : memref<2x128x128xbf16, #tpu.memory_space<vmem>>, vector<1x128x128xbf16>
    %3 = vector.shape_cast %2 : vector<1x128x128xbf16> to vector<128x128xbf16>
    %cst = arith.constant dense<0.000000e+00> : vector<32x128xf32>
    %4 = tpu.matmul %1, %3, %cst {dimension_numbers = #tpu.dot_dimension_numbers<[1], [0], [0], [1], [0, 0, 1, 1], [], []>} : vector<32x128xbf16>, vector<128x128xbf16>, vector<32x128xf32> -> vector<32x128xf32>
    %5 = arith.truncf %4 : vector<32x128xf32> to vector<32x128xbf16>
    %cst_6 = arith.constant dense<0.000000e+00> : vector<32x128xf32>
    %6 = tpu.matmul %0, %5, %cst_6 {dimension_numbers = #tpu.dot_dimension_numbers<[1], [0], [0], [1], [0, 0, 1, 1], [], []>} : vector<32x32xbf16>, vector<32x128xbf16>, vector<32x128xf32> -> vector<32x128xf32>
    %c0_7 = arith.constant 0 : index
    %c0_8 = arith.constant 0 : index
    %c0_9 = arith.constant 0 : index
    %7 = vector.load %arg4[%c0_7, %c0_8, %c0_9] : memref<2x1x128xf32, #tpu.memory_space<vmem>>, vector<1x1x128xf32>
    %8 = vector.shape_cast %7 : vector<1x1x128xf32> to vector<1x128xf32>
    %9 = vector.broadcast %8 : vector<1x128xf32> to vector<32x128xf32>
    %10 = arith.addf %6, %9 : vector<32x128xf32>
    %cst_10 = arith.constant 0.000000e+00 : f32
    %11 = vector.broadcast %cst_10 : f32 to vector<32x128xf32>
    %12 = arith.maximumf %10, %11 : vector<32x128xf32>
    %13 = arith.truncf %12 : vector<32x128xf32> to vector<32x128xbf16>
    %c1 = arith.constant 1 : index
    %c0_11 = arith.constant 0 : index
    %c0_12 = arith.constant 0 : index
    %14 = vector.load %arg3[%c1, %c0_11, %c0_12] : memref<2x128x128xbf16, #tpu.memory_space<vmem>>, vector<1x128x128xbf16>
    %15 = vector.shape_cast %14 : vector<1x128x128xbf16> to vector<128x128xbf16>
    %cst_13 = arith.constant dense<0.000000e+00> : vector<32x128xf32>
    %16 = tpu.matmul %13, %15, %cst_13 {dimension_numbers = #tpu.dot_dimension_numbers<[1], [0], [0], [1], [0, 0, 1, 1], [], []>} : vector<32x128xbf16>, vector<128x128xbf16>, vector<32x128xf32> -> vector<32x128xf32>
    %17 = arith.truncf %16 : vector<32x128xf32> to vector<32x128xbf16>
    %cst_14 = arith.constant dense<0.000000e+00> : vector<32x128xf32>
    %18 = tpu.matmul %0, %17, %cst_14 {dimension_numbers = #tpu.dot_dimension_numbers<[1], [0], [0], [1], [0, 0, 1, 1], [], []>} : vector<32x32xbf16>, vector<32x128xbf16>, vector<32x128xf32> -> vector<32x128xf32>
    %c1_15 = arith.constant 1 : index
    %c0_16 = arith.constant 0 : index
    %c0_17 = arith.constant 0 : index
    %19 = vector.load %arg4[%c1_15, %c0_16, %c0_17] : memref<2x1x128xf32, #tpu.memory_space<vmem>>, vector<1x1x128xf32>
    %20 = vector.shape_cast %19 : vector<1x1x128xf32> to vector<1x128xf32>
    %21 = vector.broadcast %20 : vector<1x128xf32> to vector<32x128xf32>
    %22 = arith.addf %18, %21 : vector<32x128xf32>
    %c0_18 = arith.constant 0 : index
    %c0_19 = arith.constant 0 : index
    %23 = vector.load %arg5[%c0_18, %c0_19] : memref<32x128xf32, #tpu.memory_space<vmem>>, vector<32x128xf32>
    tpu.vector_store %arg5[%c0_18, %c0_19], %22 {strides = array<i32>} : memref<32x128xf32, #tpu.memory_space<vmem>>, vector<32x128xf32>,
    return
  }
  func.func @transform_0(%arg0: i32) -> (i32, i32) {
    %c0_i32 = arith.constant 0 : i32
    %c0_i32_0 = arith.constant 0 : i32
    %c0_i32_1 = arith.constant 0 : i32
    return %c0_i32, %c0_i32_0 : i32, i32
  }
  func.func @transform_1(%arg0: i32) -> (i32, i32) {
    %c0_i32 = arith.constant 0 : i32
    %c0_i32_0 = arith.constant 0 : i32
    %c0_i32_1 = arith.constant 0 : i32
    return %c0_i32, %c0_i32_0 : i32, i32
  }
  func.func @transform_2(%arg0: i32) -> (i32, i32, i32) {
    %c0_i32 = arith.constant 0 : i32
    %c0_i32_0 = arith.constant 0 : i32
    %c0_i32_1 = arith.constant 0 : i32
    %c0_i32_2 = arith.constant 0 : i32
    return %c0_i32, %c0_i32_0, %c0_i32_1 : i32, i32, i32
  }
  func.func @transform_3(%arg0: i32) -> (i32, i32, i32) {
    %c0_i32 = arith.constant 0 : i32
    %c0_i32_0 = arith.constant 0 : i32
    %c0_i32_1 = arith.constant 0 : i32
    %c0_i32_2 = arith.constant 0 : i32
    return %c0_i32, %c0_i32_0, %c0_i32_1 : i32, i32, i32
  }
  func.func @transform_4(%arg0: i32) -> (i32, i32) {
    %c0_i32 = arith.constant 0 : i32
    %c0_i32_0 = arith.constant 0 : i32
    %c0_i32_1 = arith.constant 0 : i32
    return %c0_i32, %c0_i32_0 : i32, i32
  }
}

</mosaic_0001>

<llo_original>
// kernel: tpu_custom_call.1
$region0: #{tpu_custom_call.1}
  #allocation0 [shape = 'u32[]', space=smem, size = 0x4, offset = 0x4, fixed_abs, tag = 'smem constant byte address 0x4 - core index']
  #allocation1 [shape = 'u32[72,128]{1,0:T(1,128)}', space=vmem, size = 0x9000, scoped, tag = 'internal scratch']
  %s0 = inlined_call_operand.hbm [shape: bf16[32,32], index: 0, kind: input, shape index: {}]
  %s1 = inlined_call_operand.hbm [shape: bf16[32,128], index: 1, kind: input, shape index: {}]
  %s2 = inlined_call_operand.hbm [shape: bf16[2,128,128], index: 2, kind: input, shape index: {}]
  %s3 = inlined_call_operand.vmem [shape: f32[2,1,128], index: 3, kind: input, shape index: {}]
  %s4 = inlined_call_operand.hbm [shape: f32[32,128], index: 4, kind: output, shape index: {}]
  %s5 = sld [smem:[#allocation0]]
  $region38: #{tpu_custom_call.1} parent=0
    _
  %s7 = ssub.s32 1, %s5
  %s8 = scalar_select 0, %s7, %s5
  $region1: #{tpu_custom_call.1} parent=0
    #allocation2 [shape = 'u8[8192]{0}', space=vmem, size = 0x2000, scoped, tag = 'input window, operand 0, single buffered']
    #allocation3 [shape = 's32[1]{0}', space=sflag, size = 0x4, scoped, tag = 'scoped memory for tpu_custom_call.1']
    #allocation4 [shape = 's32[1]{0}', space=sflag, size = 0x4, scoped, tag = 'scoped memory for tpu_custom_call.1']
    #allocation5 [shape = 'u8[8192]{0}', space=vmem, size = 0x2000, scoped, tag = 'input window, operand 1, single buffered']
    #allocation6 [shape = 's32[1]{0}', space=sflag, size = 0x4, scoped, tag = 'scoped memory for tpu_custom_call.1']
    #allocation7 [shape = 'u8[65536]{0}', space=vmem, size = 0x10000, scoped, tag = 'input window, operand 2, single buffered']
    #allocation8 [shape = 'u8[16384]{0}', space=vmem, size = 0x4000, scoped, tag = 'output window, operand 0, single buffered']
    %9 = vsyncpa [#allocation3], 0
    %10 = vsyncpa [#allocation6], 0
    %11 = vsyncpa [#allocation4], 0
    // Predicated region
    $region2: #{tpu_custom_call.1} parent=1 // pred_check
      _
    $region3: #{tpu_custom_call.1} parent=1 // pred_check_branch
      %13 = sbr.rel (0) target = $region5
    $region4: #{tpu_custom_call.1} parent=1 // pred_region
      %15 = vsyncadd [#allocation3], 0
      %s16 = sshll.u32 %s0, 4
      %s17 = int_to_ptr.hbm [resolvable:$true] %s16
      %s18 = sshll.u32 [#allocation2], 4
      %s19 = int_to_ptr.vmem [resolvable:$true] %s18
      %24 = dma.hbm_to_vmem [thread:$0]  %s17, 256, %s19, [#allocation3], 64, 64, 4
    $region5: #{tpu_custom_call.1} parent=1 // pred_fallthru
      _
    // Predicated region
    $region6: #{tpu_custom_call.1} parent=1 // pred_check
      _
    $region7: #{tpu_custom_call.1} parent=1 // pred_check_branch
      %26 = sbr.rel (0) target = $region9
    $region8: #{tpu_custom_call.1} parent=1 // pred_region
      %28 = vsyncadd [#allocation6], 0
      %s29 = sshll.u32 %s1, 4
      %s30 = int_to_ptr.hbm [resolvable:$true] %s29
      %s31 = sshll.u32 [#allocation5], 4
      %s32 = int_to_ptr.vmem [resolvable:$true] %s31
      %37 = dma.hbm_to_vmem [thread:$0]  %s30, 256, %s32, [#allocation6], 64, 64, 4
    $region9: #{tpu_custom_call.1} parent=1 // pred_fallthru
      _
    // Predicated region
    $region10: #{tpu_custom_call.1} parent=1 // pred_check
      _
    $region11: #{tpu_custom_call.1} parent=1 // pred_check_branch
      %39 = sbr.rel (0) target = $region13
    $region12: #{tpu_custom_call.1} parent=1 // pred_region
      %41 = vsyncadd [#allocation6], 0
      %s42 = sshll.u32 %s2, 4
      %s43 = int_to_ptr.hbm [resolvable:$true] %s42
      %s44 = sshll.u32 [#allocation7], 4
      %s45 = int_to_ptr.vmem [resolvable:$true] %s44
      %50 = dma.hbm_to_vmem [thread:$0]  %s43, 2048, %s45, [#allocation6], 64, 64, 4
    $region13: #{tpu_custom_call.1} parent=1 // pred_fallthru
      _
    // Predicated region
    $region14: #{tpu_custom_call.1} parent=1 // pred_check
      _
    $region15: #{tpu_custom_call.1} parent=1 // pred_check_branch
      %52 = sbr.rel (0) target = $region17
    $region16: #{tpu_custom_call.1} parent=1 // pred_region
      _
    $region17: #{tpu_custom_call.1} parent=1 // pred_fallthru
      _
    // Predicated region
    $region18: #{tpu_custom_call.1} parent=1 // pred_check
      _
    $region19: #{tpu_custom_call.1} parent=1 // pred_check_branch
      %54 = sbr.rel (0) target = $region21
    $region20: #{tpu_custom_call.1} parent=1 // pred_region
      %56 = dma.done [#allocation3], 256
    $region21: #{tpu_custom_call.1} parent=1 // pred_fallthru
      _
    // Predicated region
    $region22: #{tpu_custom_call.1} parent=1 // pred_check
      _
    $region23: #{tpu_custom_call.1} parent=1 // pred_check_branch
      %58 = sbr.rel (0) target = $region25
    $region24: #{tpu_custom_call.1} parent=1 // pred_region
      %60 = dma.done [#allocation6], 256
    $region25: #{tpu_custom_call.1} parent=1 // pred_fallthru
      _
    // Predicated region
    $region26: #{tpu_custom_call.1} parent=1 // pred_check
      _
    $region27: #{tpu_custom_call.1} parent=1 // pred_check_branch
      %62 = sbr.rel (0) target = $region29
    $region28: #{tpu_custom_call.1} parent=1 // pred_region
      %64 = dma.done [#allocation6], 2048
    $region29: #{tpu_custom_call.1} parent=1 // pred_fallthru
      _
    %v66 = vld [vmem:[#allocation2] sm:$0xf]
    %v67 = vld [vmem:[#allocation2 + $0x4] sm:$0xf]
    %v68 = vld [vmem:[#allocation2 + $0x8] sm:$0xf]
    %v69 = vld [vmem:[#allocation2 + $0xc] sm:$0xf]
    %v70 = vld [vmem:[#allocation5] sm:$0xf]
    %v71 = vld [vmem:[#allocation5 + $0x4] sm:$0xf]
    %v72 = vld [vmem:[#allocation5 + $0x8] sm:$0xf]
    %v73 = vld [vmem:[#allocation5 + $0xc] sm:$0xf]
    %v74 = vld [vmem:[#allocation7] sm:$0xf]
    %v75 = vld [vmem:[#allocation7 + $0x4] sm:$0xf]
    %v76 = vld [vmem:[#allocation7 + $0x8] sm:$0xf]
    %v77 = vld [vmem:[#allocation7 + $0xc] sm:$0xf]
    %v78 = vld [vmem:[#allocation7 + $0x10] sm:$0xf]
    %v79 = vld [vmem:[#allocation7 + $0x14] sm:$0xf]
    %v80 = vld [vmem:[#allocation7 + $0x18] sm:$0xf]
    %v81 = vld [vmem:[#allocation7 + $0x1c] sm:$0xf]
    %v82 = vld [vmem:[#allocation7 + $0x20] sm:$0xf]
    %v83 = vld [vmem:[#allocation7 + $0x24] sm:$0xf]
    %v84 = vld [vmem:[#allocation7 + $0x28] sm:$0xf]
    %v85 = vld [vmem:[#allocation7 + $0x2c] sm:$0xf]
    %v86 = vld [vmem:[#allocation7 + $0x30] sm:$0xf]
    %v87 = vld [vmem:[#allocation7 + $0x34] sm:$0xf]
    %v88 = vld [vmem:[#allocation7 + $0x38] sm:$0xf]
    %v89 = vld [vmem:[#allocation7 + $0x3c] sm:$0xf]
    %v94 = vunpack.c.l.b16 %v70
    %v95 = vunpack.c.l.b16 %v71
    %v96 = vunpack.c.l.b16 %v72
    %v97 = vunpack.c.l.b16 %v73
    %v98 = vpack.c.b16 %v95, %v94
    %v99 = vpack.c.b16 %v97, %v96
    %v118 = vunpack.c.l.b16 %v74
    %v119 = vunpack.c.l.b16 %v75
    %v120 = vunpack.c.l.b16 %v76
    %v121 = vunpack.c.l.b16 %v77
    %v122 = vunpack.c.l.b16 %v78
    %v123 = vunpack.c.l.b16 %v79
    %v124 = vunpack.c.l.b16 %v80
    %v125 = vunpack.c.l.b16 %v81
    %v126 = vunpack.c.l.b16 %v82
    %v127 = vunpack.c.l.b16 %v83
    %v128 = vunpack.c.l.b16 %v84
    %v129 = vunpack.c.l.b16 %v85
    %v130 = vunpack.c.l.b16 %v86
    %v131 = vunpack.c.l.b16 %v87
    %v132 = vunpack.c.l.b16 %v88
    %v133 = vunpack.c.l.b16 %v89
    %v134 = vpack.c.b16 %v119, %v118
    %v135 = vpack.c.b16 %v121, %v120
    %v136 = vpack.c.b16 %v123, %v122
    %v137 = vpack.c.b16 %v125, %v124
    %v138 = vpack.c.b16 %v127, %v126
    %v139 = vpack.c.b16 %v129, %v128
    %v140 = vpack.c.b16 %v131, %v130
    %v141 = vpack.c.b16 %v133, %v132
    %150 = vmatpush.bf16.msra.mxu0 %v141
    %151 = vmatpush.bf16.msra.mxu0 %v140
    %152 = vmatpush.bf16.msra.mxu0 %v139
    %153 = vmatpush.bf16.msra.mxu0 %v138
    %154 = vmatpush.bf16.msra.mxu0 %v137
    %155 = vmatpush.bf16.msra.mxu0 %v136
    %156 = vmatpush.bf16.msra.mxu0 %v135
    %157 = vmatpush.bf16.msra.mxu0 %v134
    %158 = vmatmul.bf16.gmra.mxu0 %v98
    %v159 = vpop.f32.mrf.mxu0
    %v160 = vadd.f32 0.0, %v159
    %v161 = vpop.f32.mrf.mxu0
    %v162 = vadd.f32 0.0, %v161
    %163 = vmatmul.bf16.gmra.mxu0 %v99
    %v164 = vpop.f32.mrf.mxu0
    %v165 = vadd.f32 0.0, %v164
    %v166 = vpop.f32.mrf.mxu0
    %v167 = vadd.f32 0.0, %v166
    %168 = vdwg.mxu0
    %v169 = vpack.c.bf16 %v162, %v160
    %v170 = vpack.c.bf16 %v167, %v165
    %v171 = vld [vmem:[%s3] sm:$0x1]
    %v173 = vperm.slane %v171, 0
    %v179 = vunpack.c.l.b16 %v66
    %v180 = vunpack.c.l.b16 %v67
    %v181 = vunpack.c.l.b16 %v68
    %v182 = vunpack.c.l.b16 %v69
    %v183 = vpack.c.b16 %v180, %v179
    %v184 = vpack.c.b16 %v182, %v181
    %vm185 = vcmask 261120
    %v187 = vsel %vm185, %v183, 0
    %v190 = vsel %vm185, %v184, 0
    %192 = vmatpush.bf16.msra.mxu0 0
    %193 = vmatpush.bf16.msra.mxu0 0
    %194 = vmatpush.bf16.msra.mxu0 0
    %195 = vmatpush.bf16.msra.mxu0 0
    %196 = vmatpush.bf16.msra.mxu0 0
    %197 = vmatpush.bf16.msra.mxu0 0
    %198 = vmatpush.bf16.msra.mxu0 %v170
    %199 = vmatpush.bf16.msra.mxu0 %v169
    %200 = vmatmul.bf16.gmra.mxu0 %v187
    %v201 = vpop.f32.mrf.mxu0
    %v202 = vadd.f32 %v173, %v201
    %v203 = vpop.f32.mrf.mxu0
    %v204 = vadd.f32 %v173, %v203
    %205 = vmatmul.bf16.gmra.mxu0 %v190
    %v206 = vpop.f32.mrf.mxu0
    %v207 = vadd.f32 %v173, %v206
    %v208 = vpop.f32.mrf.mxu0
    %v209 = vadd.f32 %v173, %v208
    %210 = vdwg.mxu0
    %v211 = vmax.f32 %v202, 0.0
    %v212 = vmax.f32 %v204, 0.0
    %v213 = vmax.f32 %v207, 0.0
    %v214 = vmax.f32 %v209, 0.0
    %v215 = vpack.c.bf16 %v212, %v211
    %v216 = vpack.c.bf16 %v214, %v213
    %s217 = scalar_lea.vmem [#allocation7], 64
    %v218 = vld [vmem:[%s217] sm:$0xf]
    %v219 = vld [vmem:[%s217 + $0x4] sm:$0xf]
    %v220 = vld [vmem:[%s217 + $0x8] sm:$0xf]
    %v221 = vld [vmem:[%s217 + $0xc] sm:$0xf]
    %v222 = vld [vmem:[%s217 + $0x10] sm:$0xf]
    %v223 = vld [vmem:[%s217 + $0x14] sm:$0xf]
    %v224 = vld [vmem:[%s217 + $0x18] sm:$0xf]
    %v225 = vld [vmem:[%s217 + $0x1c] sm:$0xf]
    %v226 = vld [vmem:[%s217 + $0x20] sm:$0xf]
    %v227 = vld [vmem:[%s217 + $0x24] sm:$0xf]
    %v228 = vld [vmem:[%s217 + $0x28] sm:$0xf]
    %v229 = vld [vmem:[%s217 + $0x2c] sm:$0xf]
    %v230 = vld [vmem:[%s217 + $0x30] sm:$0xf]
    %v231 = vld [vmem:[%s217 + $0x34] sm:$0xf]
    %v232 = vld [vmem:[%s217 + $0x38] sm:$0xf]
    %v233 = vld [vmem:[%s217 + $0x3c] sm:$0xf]
    %v250 = vunpack.c.l.b16 %v218
    %v251 = vunpack.c.l.b16 %v219
    %v252 = vunpack.c.l.b16 %v220
    %v253 = vunpack.c.l.b16 %v221
    %v254 = vunpack.c.l.b16 %v222
    %v255 = vunpack.c.l.b16 %v223
    %v256 = vunpack.c.l.b16 %v224
    %v257 = vunpack.c.l.b16 %v225
    %v258 = vunpack.c.l.b16 %v226
    %v259 = vunpack.c.l.b16 %v227
    %v260 = vunpack.c.l.b16 %v228
    %v261 = vunpack.c.l.b16 %v229
    %v262 = vunpack.c.l.b16 %v230
    %v263 = vunpack.c.l.b16 %v231
    %v264 = vunpack.c.l.b16 %v232
    %v265 = vunpack.c.l.b16 %v233
    %v266 = vpack.c.b16 %v251, %v250
    %v267 = vpack.c.b16 %v253, %v252
    %v268 = vpack.c.b16 %v255, %v254
    %v269 = vpack.c.b16 %v257, %v256
    %v270 = vpack.c.b16 %v259, %v258
    %v271 = vpack.c.b16 %v261, %v260
    %v272 = vpack.c.b16 %v263, %v262
    %v273 = vpack.c.b16 %v265, %v264
    %282 = vmatpush.bf16.msra.mxu0 %v273
    %283 = vmatpush.bf16.msra.mxu0 %v272
    %284 = vmatpush.bf16.msra.mxu0 %v271
    %285 = vmatpush.bf16.msra.mxu0 %v270
    %286 = vmatpush.bf16.msra.mxu0 %v269
    %287 = vmatpush.bf16.msra.mxu0 %v268
    %288 = vmatpush.bf16.msra.mxu0 %v267
    %289 = vmatpush.bf16.msra.mxu0 %v266
    %290 = vmatmul.bf16.gmra.mxu0 %v215
    %v291 = vpop.f32.mrf.mxu0
    %v292 = vadd.f32 0.0, %v291
    %v293 = vpop.f32.mrf.mxu0
    %v294 = vadd.f32 0.0, %v293
    %295 = vmatmul.bf16.gmra.mxu0 %v216
    %v296 = vpop.f32.mrf.mxu0
    %v297 = vadd.f32 0.0, %v296
    %v298 = vpop.f32.mrf.mxu0
    %v299 = vadd.f32 0.0, %v298
    %300 = vdwg.mxu0
    %v301 = vpack.c.bf16 %v294, %v292
    %v302 = vpack.c.bf16 %v299, %v297
    %s303 = scalar_lea.vmem %s3, 1
    %v304 = vld [vmem:[%s303] sm:$0x1]
    %v306 = vperm.slane %v304, 0
    %308 = vmatpush.bf16.msra.mxu0 0
    %309 = vmatpush.bf16.msra.mxu0 0
    %310 = vmatpush.bf16.msra.mxu0 0
    %311 = vmatpush.bf16.msra.mxu0 0
    %312 = vmatpush.bf16.msra.mxu0 0
    %313 = vmatpush.bf16.msra.mxu0 0
    %314 = vmatpush.bf16.msra.mxu0 %v302
    %315 = vmatpush.bf16.msra.mxu0 %v301
    %316 = vmatmul.bf16.gmra.mxu0 %v187
    %v317 = vpop.f32.mrf.mxu0
    %v318 = vadd.f32 %v306, %v317
    %v319 = vpop.f32.mrf.mxu0
    %v320 = vadd.f32 %v306, %v319
    %321 = vmatmul.bf16.gmra.mxu0 %v190
    %v322 = vpop.f32.mrf.mxu0
    %v323 = vadd.f32 %v306, %v322
    %v324 = vpop.f32.mrf.mxu0
    %v325 = vadd.f32 %v306, %v324
    %326 = vdwg.mxu0
    %327 = vst [vmem:[#allocation8] sm:$0xff] %v318
    %328 = vst [vmem:[#allocation8 + $0x8] sm:$0xff] %v320
    %329 = vst [vmem:[#allocation8 + $0x10] sm:$0xff] %v323
    %330 = vst [vmem:[#allocation8 + $0x18] sm:$0xff] %v325
    // Predicated region
    $region30: #{tpu_custom_call.1} parent=1 // pred_check
      _
    $region31: #{tpu_custom_call.1} parent=1 // pred_check_branch
      %332 = sbr.rel (0) target = $region33
    $region32: #{tpu_custom_call.1} parent=1 // pred_region
      %334 = vsyncadd [#allocation4], 0
      %s335 = sshll.u32 [#allocation8], 4
      %s336 = int_to_ptr.vmem [resolvable:$true] %s335
      %s337 = sshll.u32 %s4, 4
      %s338 = int_to_ptr.hbm [resolvable:$true] %s337
      %343 = dma.vmem_to_hbm [thread:$0]  %s336, 512, %s338, [#allocation4], 128, 128, 8
    $region33: #{tpu_custom_call.1} parent=1 // pred_fallthru
      _
    // Predicated region
    $region34: #{tpu_custom_call.1} parent=1 // pred_check
      _
    $region35: #{tpu_custom_call.1} parent=1 // pred_check_branch
      %345 = sbr.rel (0) target = $region37
    $region36: #{tpu_custom_call.1} parent=1 // pred_region
      %347 = dma.done [#allocation4], 512
    $region37: #{tpu_custom_call.1} parent=1 // pred_fallthru
      _
    %348 = vsyncpa [#allocation3], 1
    %349 = vsyncpa [#allocation6], 1
    %350 = vsyncpa [#allocation4], 1

</llo_original>
